<compile_context>
chip_gen: v7x
topology: tpu7x:2x2x1
jax: 0.10.0
libtpu: 0.0.40
codegen_flags: <defaults>
</compile_context>

<pallas_src>
import functools

import jax
import jax.numpy as jnp
from jax import lax
from jax.experimental import pallas as pl
from jax.experimental.pallas import tpu as pltpu

_BN_EPS = 1e-5


# ----------------------------- Pallas kernel ------------------------------- #

def _fused_conv_bn_relu_kernel(w_ref, p_ref, gamma_ref, beta_ref, o_ref):
    """Fused: y = W @ patches^T ; BN(train-mode batch stats) ; ReLU.

    w_ref:     (Cout, K)   float32
    p_ref:     (K, M)      float32   (M = N*OH*OW, lane-dense)
    gamma_ref: (Cout, 1)   float32
    beta_ref:  (Cout, 1)   float32
    o_ref:     (Cout, M)   float32
    """
    # MXU matmul, f32 accumulate; output lane dim = M (multiple of 128 here).
    y = jnp.dot(w_ref[...], p_ref[...], preferred_element_type=jnp.float32)

    # Train-mode BatchNorm: batch mean & biased variance over (N, OH, OW) == M axis.
    # Two-pass variance for numerical robustness. Reductions are along lanes (XLU).
    mean = jnp.mean(y, axis=-1, keepdims=True)                   # (Cout, 1)
    centered = y - mean
    var = jnp.mean(centered * centered, axis=-1, keepdims=True)  # (Cout, 1), biased
    inv_std = lax.rsqrt(var + _BN_EPS)

    scale = gamma_ref[...] * inv_std                             # (Cout, 1)
    o_ref[...] = jnp.maximum(centered * scale + beta_ref[...], 0.0)


# ------------------------------- JAX glue ---------------------------------- #

def _im2col_t(x, kh, kw, stride, padding):
    """x: (N, C, H, W) -> patches^T of shape (C*KH*KW, N*OH*OW).

    K rows ordered (C, KH, KW) to match PyTorch weight.reshape(Cout, -1);
    M columns ordered (N, OH, OW).
    """
    n, c, h, w = x.shape
    xp = jnp.pad(x, ((0, 0), (0, 0), (padding, padding), (padding, padding)))
    oh = (h + 2 * padding - kh) // stride + 1
    ow = (w + 2 * padding - kw) // stride + 1
    cols = []
    for i in range(kh):
        for j in range(kw):
            cols.append(xp[:, :, i:i + stride * oh:stride, j:j + stride * ow:stride])
    # (N, C, KH*KW, OH, OW)
    patches = jnp.stack(cols, axis=2)
    # -> (C, KH*KW, N, OH, OW) -> (C*KH*KW, N*OH*OW)
    patches_t = patches.transpose(1, 2, 0, 3, 4).reshape(c * kh * kw, n * oh * ow)
    return patches_t, oh, ow


@functools.partial(jax.jit, static_argnames=("stride", "padding"))
def conv_block_forward(x, conv_w, conv_b, bn_gamma, bn_beta, *, stride=1, padding=0):
    """Forward pass of ConvBlock (Conv2d -> BatchNorm2d(train) -> ReLU).

    x:        (N, Cin, H, W)   float32  (NCHW, PyTorch convention)
    conv_w:   (Cout, Cin, KH, KW)
    conv_b:   (Cout,)   -- unused in the hot path: train-mode BatchNorm's per-channel
                           mean subtraction cancels a per-channel bias exactly.
    bn_gamma: (Cout,)
    bn_beta:  (Cout,)
    returns:  (N, Cout, OH, OW) float32
    """
    del conv_b  # mathematically a no-op under train-mode BatchNorm
    n, cin, h, w = x.shape
    cout, _, kh, kw = conv_w.shape

    patches_t, oh, ow = _im2col_t(x, kh, kw, stride, padding)    # (K, M)
    k, m = patches_t.shape

    w_mat = conv_w.reshape(cout, cin * kh * kw)                  # (Cout, K)
    gamma_col = bn_gamma.reshape(cout, 1)
    beta_col = bn_beta.reshape(cout, 1)

    # Entire problem (~90 KB for the toy shapes) fits in one VMEM tile: single
    # grid step, blocks = full arrays (satisfies the (8,128) rule via full-dim blocks).
    out_cm = pl.pallas_call(
        _fused_conv_bn_relu_kernel,
        out_shape=jax.ShapeDtypeStruct((cout, m), jnp.float32),
        grid=(1,),
        in_specs=[
            pl.BlockSpec((cout, k), lambda i: (0, 0)),           # weight (Cout, K)
            pl.BlockSpec((k, m), lambda i: (0, 0)),              # patches^T (K, M)
            pl.BlockSpec((cout, 1), lambda i: (0, 0)),           # gamma column
            pl.BlockSpec((cout, 1), lambda i: (0, 0)),           # beta column
        ],
        out_specs=pl.BlockSpec((cout, m), lambda i: (0, 0)),     # (Cout, M) lane-dense
        compiler_params=pltpu.CompilerParams(
            dimension_semantics=("arbitrary",),
        ),
    )(w_mat, patches_t, gamma_col, beta_col)

    # (Cout, M) with M ordered (N, OH, OW) -> NCHW
    out = out_cm.reshape(cout, n, oh, ow).transpose(1, 0, 2, 3)
    return out


# ------------------------------- reference --------------------------------- #

def _reference(x, conv_w, conv_b, bn_gamma, bn_beta, stride, padding):
    y = lax.conv_general_dilated(
        x, conv_w,
        window_strides=(stride, stride),
        padding=[(padding, padding), (padding, padding)],
        dimension_numbers=("NCHW", "OIHW", "NCHW"),
    ) + conv_b.reshape(1, -1, 1, 1)
    mean = jnp.mean(y, axis=(0, 2, 3), keepdims=True)
    var = jnp.mean((y - mean) ** 2, axis=(0, 2, 3), keepdims=True)   # biased
    y = (y - mean) / jnp.sqrt(var + _BN_EPS)
    y = y * bn_gamma.reshape(1, -1, 1, 1) + bn_beta.reshape(1, -1, 1, 1)
    return jnp.maximum(y, 0.0)


# --------------------------------- main ------------------------------------ #

if __name__ == "__main__":
    # Shapes consistent with ConvBlock(in_channels=4, out_channels=8,
    # kernel_size=3, stride=1, padding=1) applied to (2, 4, 16, 16).
    N, CIN, H, W = 2, 4, 16, 16
    COUT, KS, STRIDE, PAD = 8, 3, 1, 1

    key = jax.random.PRNGKey(0)
    kx, kw, kb, kg, kbeta = jax.random.split(key, 5)

    x = jax.random.normal(kx, (N, CIN, H, W), dtype=jnp.float32)
    conv_w = jax.random.normal(kw, (COUT, CIN, KS, KS), dtype=jnp.float32) * 0.1
    conv_b = jax.random.normal(kb, (COUT,), dtype=jnp.float32) * 0.1
    bn_gamma = 1.0 + 0.1 * jax.random.normal(kg, (COUT,), dtype=jnp.float32)
    bn_beta = 0.1 * jax.random.normal(kbeta, (COUT,), dtype=jnp.float32)

    out = conv_block_forward(x, conv_w, conv_b, bn_gamma, bn_beta,
                             stride=STRIDE, padding=PAD)
    out = jax.block_until_ready(out)

    ref = _reference(x, conv_w, conv_b, bn_gamma, bn_beta, STRIDE, PAD)
    assert out.shape == (N, COUT, H, W), out.shape
    assert jnp.max(jnp.abs(out - ref)) < 1e-3, float(jnp.max(jnp.abs(out - ref)))

    print("KERNEL_OK")
</pallas_src>

<mosaic_0001>
module attributes {stable_mosaic.version = 11 : i64} {
  func.func @_fused_conv_bn_relu_kernel(%arg0: i32, %arg1: memref<8x36xf32, #tpu.memory_space<vmem>>, %arg2: memref<36x512xf32, #tpu.memory_space<vmem>>, %arg3: memref<8x1xf32, #tpu.memory_space<vmem>>, %arg4: memref<8x1xf32, #tpu.memory_space<vmem>>, %arg5: memref<8x512xf32, #tpu.memory_space<vmem>>) attributes {dimension_semantics = [#tpu.dimension_semantics<arbitrary>], iteration_bounds = array<i64: 1>, scalar_prefetch = 0 : i64, scratch_operands = 0 : i64, tpu.core_type = #tpu.core_type<tc>, window_params = [{pipeline_mode = #tpu.pipeline_mode<synchronous>, transform_indices = @transform_0, window_bounds = array<i64: 8, 36>}, {pipeline_mode = #tpu.pipeline_mode<synchronous>, transform_indices = @transform_1, window_bounds = array<i64: 36, 512>}, {pipeline_mode = #tpu.pipeline_mode<synchronous>, transform_indices = @transform_2, window_bounds = array<i64: 8, 1>}, {pipeline_mode = #tpu.pipeline_mode<synchronous>, transform_indices = @transform_3, window_bounds = array<i64: 8, 1>}, {pipeline_mode = #tpu.pipeline_mode<synchronous>, transform_indices = @transform_4, window_bounds = array<i64: 8, 512>}]} {
    %c0 = arith.constant 0 : index
    %c0_0 = arith.constant 0 : index
    %0 = vector.load %arg1[%c0, %c0_0] : memref<8x36xf32, #tpu.memory_space<vmem>>, vector<8x36xf32>
    %c0_1 = arith.constant 0 : index
    %c0_2 = arith.constant 0 : index
    %1 = vector.load %arg2[%c0_1, %c0_2] : memref<36x512xf32, #tpu.memory_space<vmem>>, vector<36x512xf32>
    %cst = arith.constant dense<0.000000e+00> : vector<8x512xf32>
    %2 = tpu.matmul %0, %1, %cst {dimension_numbers = #tpu.dot_dimension_numbers<[1], [0], [0], [1], [0, 0, 1, 1], [], []>} : vector<8x36xf32>, vector<36x512xf32>, vector<8x512xf32> -> vector<8x512xf32>
    %cst_3 = arith.constant dense<0.000000e+00> : vector<8xf32>
    %3 = vector.multi_reduction <add>, %2, %cst_3 [1] : vector<8x512xf32> to vector<8xf32>
    %4 = vector.shape_cast %3 : vector<8xf32> to vector<8x1xf32>
    %cst_4 = arith.constant 5.120000e+02 : f32
    %5 = vector.broadcast %cst_4 : f32 to vector<8x1xf32>
    %6 = arith.divf %4, %5 : vector<8x1xf32>
    %7 = vector.broadcast %6 : vector<8x1xf32> to vector<8x512xf32>
    %8 = arith.subf %2, %7 : vector<8x512xf32>
    %9 = arith.mulf %8, %8 : vector<8x512xf32>
    %cst_5 = arith.constant dense<0.000000e+00> : vector<8xf32>
    %10 = vector.multi_reduction <add>, %9, %cst_5 [1] : vector<8x512xf32> to vector<8xf32>
    %11 = vector.shape_cast %10 : vector<8xf32> to vector<8x1xf32>
    %cst_6 = arith.constant 5.120000e+02 : f32
    %12 = vector.broadcast %cst_6 : f32 to vector<8x1xf32>
    %13 = arith.divf %11, %12 : vector<8x1xf32>
    %cst_7 = arith.constant 9.99999974E-6 : f32
    %14 = vector.broadcast %cst_7 : f32 to vector<8x1xf32>
    %15 = arith.addf %13, %14 : vector<8x1xf32>
    %16 = math.rsqrt %15 : vector<8x1xf32>
    %c0_8 = arith.constant 0 : index
    %c0_9 = arith.constant 0 : index
    %17 = vector.load %arg3[%c0_8, %c0_9] : memref<8x1xf32, #tpu.memory_space<vmem>>, vector<8x1xf32>
    %18 = arith.mulf %17, %16 : vector<8x1xf32>
    %19 = vector.broadcast %18 : vector<8x1xf32> to vector<8x512xf32>
    %20 = arith.mulf %8, %19 : vector<8x512xf32>
    %c0_10 = arith.constant 0 : index
    %c0_11 = arith.constant 0 : index
    %21 = vector.load %arg4[%c0_10, %c0_11] : memref<8x1xf32, #tpu.memory_space<vmem>>, vector<8x1xf32>
    %22 = vector.broadcast %21 : vector<8x1xf32> to vector<8x512xf32>
    %23 = arith.addf %20, %22 : vector<8x512xf32>
    %cst_12 = arith.constant 0.000000e+00 : f32
    %24 = vector.broadcast %cst_12 : f32 to vector<8x512xf32>
    %25 = arith.maximumf %23, %24 : vector<8x512xf32>
    %c0_13 = arith.constant 0 : index
    %c0_14 = arith.constant 0 : index
    %26 = vector.load %arg5[%c0_13, %c0_14] : memref<8x512xf32, #tpu.memory_space<vmem>>, vector<8x512xf32>
    tpu.vector_store %arg5[%c0_13, %c0_14], %25 {strides = array<i32>} : memref<8x512xf32, #tpu.memory_space<vmem>>, vector<8x512xf32>,
    return
  }
  func.func @transform_0(%arg0: i32) -> (i32, i32) {
    %c0_i32 = arith.constant 0 : i32
    %c0_i32_0 = arith.constant 0 : i32
    %c0_i32_1 = arith.constant 0 : i32
    return %c0_i32, %c0_i32_0 : i32, i32
  }
  func.func @transform_1(%arg0: i32) -> (i32, i32) {
    %c0_i32 = arith.constant 0 : i32
    %c0_i32_0 = arith.constant 0 : i32
    %c0_i32_1 = arith.constant 0 : i32
    return %c0_i32, %c0_i32_0 : i32, i32
  }
  func.func @transform_2(%arg0: i32) -> (i32, i32) {
    %c0_i32 = arith.constant 0 : i32
    %c0_i32_0 = arith.constant 0 : i32
    %c0_i32_1 = arith.constant 0 : i32
    return %c0_i32, %c0_i32_0 : i32, i32
  }
  func.func @transform_3(%arg0: i32) -> (i32, i32) {
    %c0_i32 = arith.constant 0 : i32
    %c0_i32_0 = arith.constant 0 : i32
    %c0_i32_1 = arith.constant 0 : i32
    return %c0_i32, %c0_i32_0 : i32, i32
  }
  func.func @transform_4(%arg0: i32) -> (i32, i32) {
    %c0_i32 = arith.constant 0 : i32
    %c0_i32_0 = arith.constant 0 : i32
    %c0_i32_1 = arith.constant 0 : i32
    return %c0_i32, %c0_i32_0 : i32, i32
  }
}

</mosaic_0001>

<llo_original>
// kernel: conv_block_forward.1
$region0: #{conv_block_forward.1}
  #allocation0 [shape = 'u32[]', space=smem, size = 0x4, offset = 0x4, fixed_abs, tag = 'smem constant byte address 0x4 - core index']
  #allocation1 [shape = 'u32[144,128]{1,0:T(1,128)}', space=vmem, size = 0x12000, scoped, tag = 'internal scratch']
  %s0 = inlined_call_operand.vmem [shape: f32[8,36], index: 0, kind: input, shape index: {}]
  %s1 = inlined_call_operand.vmem [shape: f32[36,512], index: 1, kind: input, shape index: {}]
  %s2 = inlined_call_operand.vmem [shape: f32[8,1], index: 2, kind: input, shape index: {}]
  %s3 = inlined_call_operand.vmem [shape: f32[8,1], index: 3, kind: input, shape index: {}]
  %s4 = inlined_call_operand.vmem [shape: f32[8,512], index: 4, kind: output, shape index: {}]
  %s5 = sld [smem:[#allocation0]]
  $region26: #{conv_block_forward.1} parent=0
    _
  %s7 = ssub.s32 1, %s5
  %s8 = scalar_select 0, %s7, %s5
  // Predicated region
  $region2: #{conv_block_forward.1} parent=0 // pred_check
    _
  $region3: #{conv_block_forward.1} parent=0 // pred_check_branch
    %10 = sbr.rel (0) target = $region5
  $region4: #{conv_block_forward.1} parent=0 // pred_region
    _
  $region5: #{conv_block_forward.1} parent=0 // pred_fallthru
    _
  // Predicated region
  $region6: #{conv_block_forward.1} parent=0 // pred_check
    _
  $region7: #{conv_block_forward.1} parent=0 // pred_check_branch
    %12 = sbr.rel (0) target = $region9
  $region8: #{conv_block_forward.1} parent=0 // pred_region
    _
  $region9: #{conv_block_forward.1} parent=0 // pred_fallthru
    _
  // Predicated region
  $region10: #{conv_block_forward.1} parent=0 // pred_check
    _
  $region11: #{conv_block_forward.1} parent=0 // pred_check_branch
    %14 = sbr.rel (0) target = $region13
  $region12: #{conv_block_forward.1} parent=0 // pred_region
    _
  $region13: #{conv_block_forward.1} parent=0 // pred_fallthru
    _
  // Predicated region
  $region14: #{conv_block_forward.1} parent=0 // pred_check
    _
  $region15: #{conv_block_forward.1} parent=0 // pred_check_branch
    %16 = sbr.rel (0) target = $region17
  $region16: #{conv_block_forward.1} parent=0 // pred_region
    _
  $region17: #{conv_block_forward.1} parent=0 // pred_fallthru
    _
  %v17 = vld [vmem:[%s0] sm:$0xff]
  %v18 = vld [vmem:[%s1] sm:$0xff]
  %v19 = vld [vmem:[%s1 + $0x8] sm:$0xff]
  %v20 = vld [vmem:[%s1 + $0x10] sm:$0xff]
  %v21 = vld [vmem:[%s1 + $0x18] sm:$0xff]
  %v22 = vld [vmem:[%s1 + $0x20] sm:$0xff]
  %v23 = vld [vmem:[%s1 + $0x28] sm:$0xff]
  %v24 = vld [vmem:[%s1 + $0x30] sm:$0xff]
  %v25 = vld [vmem:[%s1 + $0x38] sm:$0xff]
  %v26 = vld [vmem:[%s1 + $0x40] sm:$0xff]
  %v27 = vld [vmem:[%s1 + $0x48] sm:$0xff]
  %v28 = vld [vmem:[%s1 + $0x50] sm:$0xff]
  %v29 = vld [vmem:[%s1 + $0x58] sm:$0xff]
  %v30 = vld [vmem:[%s1 + $0x60] sm:$0xff]
  %v31 = vld [vmem:[%s1 + $0x68] sm:$0xff]
  %v32 = vld [vmem:[%s1 + $0x70] sm:$0xff]
  %v33 = vld [vmem:[%s1 + $0x78] sm:$0xff]
  %v34 = vld [vmem:[%s1 + $0x80] sm:$0xf]
  %v35 = vld [vmem:[%s1 + $0x88] sm:$0xf]
  %v36 = vld [vmem:[%s1 + $0x90] sm:$0xf]
  %v37 = vld [vmem:[%s1 + $0x98] sm:$0xf]
  %vm38 = vcmask 293888
  %v40 = vsel %vm38, %v17, 0
  %vm42 = vcmask 1043456
  %v44 = vsel %vm42, %v34, 0
  %v47 = vsel %vm42, %v35, 0
  %v50 = vsel %vm42, %v36, 0
  %v53 = vsel %vm42, %v37, 0
  %55 = vmatprep.subr.mxu0 %v19
  %56 = vmatpush1.msra.mxu0 %v18
  %57 = vmatprep.subr.mxu0 %v23
  %58 = vmatpush1.msra.mxu0 %v22
  %59 = vmatprep.subr.mxu0 %v27
  %60 = vmatpush1.msra.mxu0 %v26
  %61 = vmatprep.subr.mxu0 %v31
  %62 = vmatpush1.msra.mxu0 %v30
  %63 = vmatprep.subr.mxu0 %v47
  %64 = vmatpush1.msra.mxu0 %v44
  %65 = vmatprep.subr.mxu0 0.0
  %66 = vmatpush1.msra.mxu0 0.0
  %67 = vmatprep.subr.mxu0 0.0
  %68 = vmatpush1.msra.mxu0 0.0
  %69 = vmatprep.subr.mxu0 0.0
  %70 = vmatpush1.msra.mxu0 0.0
  %71 = vmatprep.subr.mxu0 0.0
  %72 = vmatpush1.msra.mxu0 0.0
  %73 = vmatprep.subr.mxu0 0.0
  %74 = vmatpush1.msra.mxu0 0.0
  %75 = vmatprep.subr.mxu0 0.0
  %76 = vmatpush1.msra.mxu0 0.0
  %77 = vmatprep.subr.mxu0 0.0
  %78 = vmatpush1.msra.mxu0 0.0
  %79 = vmatprep.subr.mxu0 0.0
  %80 = vmatpush1.msra.mxu0 0.0
  %81 = vmatprep.subr.mxu0 0.0
  %82 = vmatpush1.msra.mxu0 0.0
  %83 = vmatprep.subr.mxu0 0.0
  %84 = vmatpush1.msra.mxu0 0.0
  %85 = vmatprep.subr.mxu0 0.0
  %86 = vmatpush1.msra.mxu0 0.0
  %87 = vmatprep.subr.mxu0 0.0
  %88 = vmatpush1.msra.mxu0 0.0
  %89 = vmatprep.subr.mxu0 0.0
  %90 = vmatpush1.msra.mxu0 0.0
  %91 = vmatprep.subr.mxu0 0.0
  %92 = vmatpush1.msra.mxu0 0.0
  %93 = vmatprep.subr.mxu0 0.0
  %94 = vmatpush1.msra.mxu0 0.0
  %95 = vmatprep.subr.mxu0 0.0
  %96 = vmatpush1.msra.mxu0 0.0
  %97 = vmatprep.subr.mxu0 0.0
  %98 = vmatpush1.msra.mxu0 0.0
  %99 = vmatprep.subr.mxu0 0.0
  %100 = vmatpush1.msra.mxu0 0.0
  %101 = vmatprep.subr.mxu0 0.0
  %102 = vmatpush1.msra.mxu0 0.0
  %103 = vmatprep.subr.mxu0 0.0
  %104 = vmatpush1.msra.mxu0 0.0
  %105 = vmatprep.subr.mxu0 0.0
  %106 = vmatpush1.msra.mxu0 0.0
  %107 = vmatprep.subr.mxu0 0.0
  %108 = vmatpush1.msra.mxu0 0.0
  %109 = vmatprep.subr.mxu0 0.0
  %110 = vmatpush1.msra.mxu0 0.0
  %111 = vmatprep.subr.mxu0 0.0
  %112 = vmatpush1.msra.mxu0 0.0
  %113 = vmatprep.subr.mxu0 0.0
  %114 = vmatpush1.msra.mxu0 0.0
  %115 = vmatprep.subr.mxu0 0.0
  %116 = vmatpush1.msra.mxu0 0.0
  %117 = vmatprep.subr.mxu0 0.0
  %118 = vmatpush1.msra.mxu0 0.0
  %119 = vmatprep.mubr.f32.mxu0 0.0
  %120 = vmatmul.mubr.f32.gmra.mrb[0].mxu0 %v40
  %v121 = vpop.f32.mrb[0].mxu0
  %v122 = vadd.f32 0.0, %v121
  %v123 = vpop.f32.mrb[0].mxu0
  %v124 = vadd.f32 0.0, %v123
  %125 = vdwg.mxu0
  %126 = vmatprep.subr.mxu0 %v21
  %127 = vmatpush1.msra.mxu0 %v20
  %128 = vmatprep.subr.mxu0 %v25
  %129 = vmatpush1.msra.mxu0 %v24
  %130 = vmatprep.subr.mxu0 %v29
  %131 = vmatpush1.msra.mxu0 %v28
  %132 = vmatprep.subr.mxu0 %v33
  %133 = vmatpush1.msra.mxu0 %v32
  %134 = vmatprep.subr.mxu0 %v53
  %135 = vmatpush1.msra.mxu0 %v50
  %136 = vmatprep.subr.mxu0 0.0
  %137 = vmatpush1.msra.mxu0 0.0
  %138 = vmatprep.subr.mxu0 0.0
  %139 = vmatpush1.msra.mxu0 0.0
  %140 = vmatprep.subr.mxu0 0.0
  %141 = vmatpush1.msra.mxu0 0.0
  %142 = vmatprep.subr.mxu0 0.0
  %143 = vmatpush1.msra.mxu0 0.0
  %144 = vmatprep.subr.mxu0 0.0
  %145 = vmatpush1.msra.mxu0 0.0
  %146 = vmatprep.subr.mxu0 0.0
  %147 = vmatpush1.msra.mxu0 0.0
  %148 = vmatprep.subr.mxu0 0.0
  %149 = vmatpush1.msra.mxu0 0.0
  %150 = vmatprep.subr.mxu0 0.0
  %151 = vmatpush1.msra.mxu0 0.0
  %152 = vmatprep.subr.mxu0 0.0
  %153 = vmatpush1.msra.mxu0 0.0
  %154 = vmatprep.subr.mxu0 0.0
  %155 = vmatpush1.msra.mxu0 0.0
  %156 = vmatprep.subr.mxu0 0.0
  %157 = vmatpush1.msra.mxu0 0.0
  %158 = vmatprep.subr.mxu0 0.0
  %159 = vmatpush1.msra.mxu0 0.0
  %160 = vmatprep.subr.mxu0 0.0
  %161 = vmatpush1.msra.mxu0 0.0
  %162 = vmatprep.subr.mxu0 0.0
  %163 = vmatpush1.msra.mxu0 0.0
  %164 = vmatprep.subr.mxu0 0.0
  %165 = vmatpush1.msra.mxu0 0.0
  %166 = vmatprep.subr.mxu0 0.0
  %167 = vmatpush1.msra.mxu0 0.0
  %168 = vmatprep.subr.mxu0 0.0
  %169 = vmatpush1.msra.mxu0 0.0
  %170 = vmatprep.subr.mxu0 0.0
  %171 = vmatpush1.msra.mxu0 0.0
  %172 = vmatprep.subr.mxu0 0.0
  %173 = vmatpush1.msra.mxu0 0.0
  %174 = vmatprep.subr.mxu0 0.0
  %175 = vmatpush1.msra.mxu0 0.0
  %176 = vmatprep.subr.mxu0 0.0
  %177 = vmatpush1.msra.mxu0 0.0
  %178 = vmatprep.subr.mxu0 0.0
  %179 = vmatpush1.msra.mxu0 0.0
  %180 = vmatprep.subr.mxu0 0.0
  %181 = vmatpush1.msra.mxu0 0.0
  %182 = vmatprep.subr.mxu0 0.0
  %183 = vmatpush1.msra.mxu0 0.0
  %184 = vmatprep.subr.mxu0 0.0
  %185 = vmatpush1.msra.mxu0 0.0
  %186 = vmatprep.subr.mxu0 0.0
  %187 = vmatpush1.msra.mxu0 0.0
  %188 = vmatprep.subr.mxu0 0.0
  %189 = vmatpush1.msra.mxu0 0.0
  %190 = vmatprep.mubr.f32.mxu0 0.0
  %191 = vmatmul.mubr.f32.gmra.mrb[0].mxu0 %v40
  %v192 = vpop.f32.mrb[0].mxu0
  %v193 = vadd.f32 0.0, %v192
  %v194 = vpop.f32.mrb[0].mxu0
  %v195 = vadd.f32 0.0, %v194
  %196 = vdwg.mxu0
  %v197 = vadd.f32 %v122, %v124
  %v198 = vadd.f32 %v197, %v193
  %v199 = vadd.f32 %v198, %v195
  %200 = vadd.xlane.f32.xlu0 %v199
  %v201 = vpop.xlane.xlu0 %200
  %v202 = vrcp.pop 512.0
  %v203 = vmul.f32 %v201, %v202
  %v204 = vsub.f32 %v122, %v203
  %v205 = vsub.f32 %v124, %v203
  %v206 = vsub.f32 %v193, %v203
  %v207 = vsub.f32 %v195, %v203
  %v208 = vmul.f32 %v204, %v204
  %v209 = vmul.f32 %v205, %v205
  %v210 = vmul.f32 %v206, %v206
  %v211 = vmul.f32 %v207, %v207
  %v212 = vadd.f32 %v208, %v209
  %v213 = vadd.f32 %v212, %v210
  %v214 = vadd.f32 %v213, %v211
  %215 = vadd.xlane.f32.xlu0 %v214
  %v216 = vpop.xlane.xlu0 %215
  %v217 = vmul.f32 %v216, %v202
  %v218 = vadd.f32 %v217, 1e-05
  %v219 = vrsqrt.pop %v218
  %v220 = vld [vmem:[%s2] sm:$0xff]
  %v221 = vmul.f32 %v220, %v219
  %223 = vset.pattern.permute.xlu0 0
  %224 = vperm.xlu0 %223, %v221
  %v225 = vpop.permute.xlu0 %224
  %v227 = vmul.f32 %v204, %v225
  %v228 = vmul.f32 %v205, %v225
  %v229 = vmul.f32 %v206, %v225
  %v230 = vmul.f32 %v207, %v225
  %v231 = vld [vmem:[%s3] sm:$0xff]
  %233 = vset.pattern.permute.xlu0 0
  %234 = vperm.xlu0 %233, %v231
  %v235 = vpop.permute.xlu0 %234
  %v237 = vadd.f32 %v227, %v235
  %v238 = vadd.f32 %v228, %v235
  %v239 = vadd.f32 %v229, %v235
  %v240 = vadd.f32 %v230, %v235
  %v241 = vmax.f32 %v237, 0.0
  %v242 = vmax.f32 %v238, 0.0
  %v243 = vmax.f32 %v239, 0.0
  %v244 = vmax.f32 %v240, 0.0
  %245 = vst [vmem:[%s4] sm:$0xff] %v241
  %246 = vst [vmem:[%s4 + $0x8] sm:$0xff] %v242
  %247 = vst [vmem:[%s4 + $0x10] sm:$0xff] %v243
  %248 = vst [vmem:[%s4 + $0x18] sm:$0xff] %v244
  // Predicated region
  $region18: #{conv_block_forward.1} parent=0 // pred_check
    _
  $region19: #{conv_block_forward.1} parent=0 // pred_check_branch
    %250 = sbr.rel (0) target = $region21
  $region20: #{conv_block_forward.1} parent=0 // pred_region
    _
  $region21: #{conv_block_forward.1} parent=0 // pred_fallthru
    _
  // Predicated region
  $region22: #{conv_block_forward.1} parent=0 // pred_check
    _
  $region23: #{conv_block_forward.1} parent=0 // pred_check_branch
    %252 = sbr.rel (0) target = $region25
  $region24: #{conv_block_forward.1} parent=0 // pred_region
    _
  $region25: #{conv_block_forward.1} parent=0 // pred_fallthru
    _

</llo_original>
